<compile_context>
chip_gen: v6e
topology: v6e:2x2x1
jax: 0.10.0
libtpu: 0.0.40
codegen_flags: <defaults>
</compile_context>

<pallas_src>
import jax
import jax.numpy as jnp
from jax.experimental import pallas as pl
from jax.experimental.pallas import tpu as pltpu


SCORE_THRESH = 0.7


def _postprocess_kernel(ts_ref, logits_ref, boxes_ref,
                        scores_ref, labels_ref, boxes_out_ref):
    b = pl.program_id(0)

    # ---- logits tile: (C, Qt) -- classes on sublanes, queries on lanes -----
    logits = logits_ref[...].astype(jnp.float32)                  # (C, Qt)
    c = logits.shape[0]

    fg = logits[: c - 1, :]                                       # foreground rows
    bg = logits[c - 1:, :]                                        # background (1, Qt)
    best = jnp.max(fg, axis=0, keepdims=True)                     # (1, Qt) fg max
    m = jnp.maximum(best, bg)                                     # (1, Qt) global max
    denom = jnp.sum(jnp.exp(logits - m), axis=0, keepdims=True)   # (1, Qt)

    # first foreground index attaining the max (argmax first-index behaviour)
    row = jax.lax.broadcasted_iota(jnp.int32, fg.shape, 0)        # (C-1, Qt)
    labels = jnp.min(jnp.where(fg == best, row, c), axis=0, keepdims=True)

    # softmax is monotone: best foreground prob = exp(best - m) / denom.
    best_prob = jnp.exp(best - m) * pl.reciprocal(denom, approx=False)

    scores_ref[...] = 1.0 - best_prob                             # (1, Qt) lane-dense
    labels_ref[...] = labels.astype(jnp.int32)                    # (1, Qt) lane-dense

    # ---- boxes: native (Qt, 4) layout, two direct column-range stores ------
    bx = boxes_ref[...].astype(jnp.float32)                       # (Qt, 4) = cx,cy,w,h
    img_h = ts_ref[b, 0]                                          # SMEM scalars
    img_w = ts_ref[b, 1]
    cxy = bx[:, 0:2]
    half_wh = 0.5 * bx[:, 2:4]
    col2 = jax.lax.broadcasted_iota(jnp.int32, cxy.shape, 1)      # (Qt, 2)
    scale2 = jnp.where(col2 == 0, img_w, img_h)                   # [x scale, y scale]
    boxes_out_ref[:, 0:2] = (cxy - half_wh) * scale2              # x1, y1
    boxes_out_ref[:, 2:4] = (cxy + half_wh) * scale2              # x2, y2


def _choose_q_blocking(Q, B):
    """Pick (padded_Q, q_tile): big tiles, lane-aligned, >=2 grid steps if possible."""
    if Q <= 1024:
        q_pad = ((Q + 127) // 128) * 128          # lane-aligned, whole Q in one block
        q_tile = q_pad
    else:
        q_pad = ((Q + 511) // 512) * 512          # 512-wide tiles for large Q
        q_tile = 512
    # v7x has two TensorCores: make sure the 'parallel' grid has >=2 steps.
    if B * (q_pad // q_tile) < 2 and q_tile % 256 == 0:
        q_tile //= 2
    return q_pad, q_tile


def postprocess_pallas(pred_logits, pred_boxes, target_sizes):
    """Returns (scores, labels, boxes_xyxy_scaled) matching PostProcessTest."""
    B, Q, C = pred_logits.shape
    assert C >= 2, "need >=1 foreground class + the background class"
    assert target_sizes.shape == (B, 2)

    q_pad, q_tile = _choose_q_blocking(Q, B)
    grid = (B, q_pad // q_tile)

    # Single wrapper-side relayout: classes onto sublanes / queries onto lanes
    # for the logits math (per perf review).  Boxes stay in native layout.
    logits_t = jnp.transpose(pred_logits, (0, 2, 1))              # [B, C, Q]
    boxes_in = pred_boxes                                         # [B, Q, 4]
    if q_pad != Q:
        logits_t = jnp.pad(logits_t, ((0, 0), (0, 0), (0, q_pad - Q)))
        boxes_in = jnp.pad(boxes_in, ((0, 0), (0, q_pad - Q), (0, 0)))
    ts = target_sizes.astype(jnp.float32)                         # tiny -> SMEM

    out_shapes = (
        jax.ShapeDtypeStruct((B, 1, q_pad), jnp.float32),   # scores (lane-dense)
        jax.ShapeDtypeStruct((B, 1, q_pad), jnp.int32),     # labels (lane-dense)
        jax.ShapeDtypeStruct((B, q_pad, 4), jnp.float32),   # boxes xyxy*scale (native)
    )

    scores_t, labels_t, boxes_out = pl.pallas_call(
        _postprocess_kernel,
        out_shape=out_shapes,
        grid=grid,
        in_specs=[
            pl.BlockSpec(memory_space=pltpu.MemorySpace.SMEM),          # target_sizes
            pl.BlockSpec((None, C, q_tile), lambda b, q: (b, 0, q)),    # logits [B,C,Q]
            pl.BlockSpec((None, q_tile, 4), lambda b, q: (b, q, 0)),    # boxes  [B,Q,4]
        ],
        out_specs=(
            pl.BlockSpec((None, 1, q_tile), lambda b, q: (b, 0, q)),    # scores
            pl.BlockSpec((None, 1, q_tile), lambda b, q: (b, 0, q)),    # labels
            pl.BlockSpec((None, q_tile, 4), lambda b, q: (b, q, 0)),    # boxes
        ),
        compiler_params=pltpu.CompilerParams(
            dimension_semantics=("parallel", "parallel"),
            vmem_limit_bytes=32 * 1024 * 1024,   # explicit headroom (v5e default 16MiB)
        ),
    )(ts, logits_t, boxes_in)

    scores = scores_t[:, 0, :Q]
    labels = labels_t[:, 0, :Q]
    boxes = boxes_out[:, :Q, :]
    return scores, labels, boxes


def postprocess_full(outputs, target_sizes, score_thresh=SCORE_THRESH):
    """Replicates PostProcessTest.forward. Returns (results, final_results)."""
    scores, labels, boxes = postprocess_pallas(
        outputs["pred_logits"], outputs["pred_boxes"], target_sizes)

    # One batched D2H transfer (implicitly blocks) instead of B round-trips.
    scores_np, labels_np, boxes_np = jax.device_get((scores, labels, boxes))

    results = [{"scores": scores[i], "labels": labels[i], "boxes": boxes[i]}
               for i in range(scores.shape[0])]

    final_results = []
    for i in range(scores_np.shape[0]):
        keep = scores_np[i] > score_thresh
        kept = boxes_np[i][keep].reshape(-1, 4).copy()
        kept[..., 2:] -= kept[..., :2]          # xyxy -> xywh
        # TODO(synk): tokenizer span extraction (cache['tokenized'].token_to_chars
        # + text slicing) is host-side string processing with no Pallas equivalent.
        final_results.append({
            "scores": scores_np[i][keep],
            "labels": [None for _ in range(kept.shape[0])],
            "boxes": kept.tolist(),
        })
    return results, final_results


if __name__ == "__main__":
    B, Q, C = 2, 256, 32        # small demo shapes; grid (B, 1) -> 2 parallel steps
    key = jax.random.PRNGKey(0)
    k1, k2 = jax.random.split(key)
    pred_logits = jax.random.normal(k1, (B, Q, C), dtype=jnp.float32)
    pred_boxes = jax.nn.sigmoid(jax.random.normal(k2, (B, Q, 4), dtype=jnp.float32))
    target_sizes = jnp.array([[480.0, 640.0], [320.0, 512.0]], dtype=jnp.float32)

    scores, labels, boxes = postprocess_pallas(pred_logits, pred_boxes, target_sizes)
    jax.block_until_ready((scores, labels, boxes))

    # ---- pure-JAX reference check ------------------------------------------
    prob = jax.nn.softmax(pred_logits, axis=-1)
    scores_want = 1.0 - jnp.max(prob[..., :-1], axis=-1)
    labels_want = jnp.argmax(prob[..., :-1], axis=-1).astype(jnp.int32)
    cx, cy, w, h = jnp.split(pred_boxes, 4, axis=-1)
    xyxy = jnp.concatenate([cx - 0.5 * w, cy - 0.5 * h,
                            cx + 0.5 * w, cy + 0.5 * h], axis=-1)
    img_h, img_w = target_sizes[:, 0], target_sizes[:, 1]
    scale = jnp.stack([img_w, img_h, img_w, img_h], axis=1)
    boxes_want = xyxy * scale[:, None, :]

    assert jnp.allclose(scores, scores_want, atol=1e-5), "scores mismatch"
    assert jnp.array_equal(labels, labels_want), "labels mismatch"
    assert jnp.allclose(boxes, boxes_want, atol=1e-3), "boxes mismatch"

    outputs = {"pred_logits": pred_logits, "pred_boxes": pred_boxes}
    results, final_results = postprocess_full(outputs, target_sizes)
    assert len(results) == B and len(final_results) == B

    print("KERNEL_OK")
</pallas_src>

<mosaic_0001>
module attributes {stable_mosaic.version = 11 : i64} {
  func.func @_postprocess_kernel(%arg0: i32, %arg1: i32, %arg2: memref<2x2xf32, #tpu.memory_space<smem>>, %arg3: memref<1x32x256xf32, #tpu.memory_space<vmem>>, %arg4: memref<1x256x4xf32, #tpu.memory_space<vmem>>, %arg5: memref<1x1x256xf32, #tpu.memory_space<vmem>>, %arg6: memref<1x1x256xi32, #tpu.memory_space<vmem>>, %arg7: memref<1x256x4xf32, #tpu.memory_space<vmem>>) attributes {dimension_semantics = [#tpu.dimension_semantics<parallel>, #tpu.dimension_semantics<parallel>], iteration_bounds = array<i64: 2, 1>, scalar_prefetch = 0 : i64, scratch_operands = 0 : i64, tpu.core_type = #tpu.core_type<tc>, window_params = [{transform_indices = @transform_0, window_bounds = array<i64: 2, 2>}, {transform_indices = @transform_1, window_bounds = array<i64: 1, 32, 256>}, {transform_indices = @transform_2, window_bounds = array<i64: 1, 256, 4>}, {transform_indices = @transform_3, window_bounds = array<i64: 1, 1, 256>}, {transform_indices = @transform_4, window_bounds = array<i64: 1, 1, 256>}, {transform_indices = @transform_5, window_bounds = array<i64: 1, 256, 4>}]} {
    %c0 = arith.constant 0 : index
    %c0_0 = arith.constant 0 : index
    %c0_1 = arith.constant 0 : index
    %0 = vector.load %arg3[%c0, %c0_0, %c0_1] : memref<1x32x256xf32, #tpu.memory_space<vmem>>, vector<1x32x256xf32>
    %1 = vector.shape_cast %0 : vector<1x32x256xf32> to vector<32x256xf32>
    %2 = vector.extract_strided_slice %1 {offsets = [0, 0], sizes = [31, 256], strides = [1, 1]} : vector<32x256xf32> to vector<31x256xf32>
    %3 = vector.extract_strided_slice %1 {offsets = [31, 0], sizes = [1, 256], strides = [1, 1]} : vector<32x256xf32> to vector<1x256xf32>
    %cst = arith.constant dense<0xFF800000> : vector<256xf32>
    %4 = vector.multi_reduction <maximumf>, %2, %cst [0] : vector<31x256xf32> to vector<256xf32>
    %5 = vector.shape_cast %4 : vector<256xf32> to vector<1x256xf32>
    %6 = arith.maximumf %5, %3 : vector<1x256xf32>
    %7 = vector.broadcast %6 : vector<1x256xf32> to vector<32x256xf32>
    %8 = arith.subf %1, %7 : vector<32x256xf32>
    %9 = math.exp %8 : vector<32x256xf32>
    %cst_2 = arith.constant dense<0.000000e+00> : vector<256xf32>
    %10 = vector.multi_reduction <add>, %9, %cst_2 [0] : vector<32x256xf32> to vector<256xf32>
    %11 = vector.shape_cast %10 : vector<256xf32> to vector<1x256xf32>
    %12 = tpu.iota {dimensions = array<i32: 0>} : vector<31x256xi32>
    %13 = vector.broadcast %5 : vector<1x256xf32> to vector<31x256xf32>
    %14 = arith.cmpf oeq, %2, %13 : vector<31x256xf32>
    %c32_i32 = arith.constant 32 : i32
    %15 = vector.broadcast %c32_i32 : i32 to vector<31x256xi32>
    %16 = arith.select %14, %12, %15 : vector<31x256xi1>, vector<31x256xi32>
    %cst_3 = arith.constant dense<2147483647> : vector<256xi32>
    %17 = vector.multi_reduction <minsi>, %16, %cst_3 [0] : vector<31x256xi32> to vector<256xi32>
    %18 = vector.shape_cast %17 : vector<256xi32> to vector<1x256xi32>
    %19 = arith.subf %5, %6 : vector<1x256xf32>
    %20 = math.exp %19 : vector<1x256xf32>
    %21 = tpu.reciprocal %11 : vector<1x256xf32> -> vector<1x256xf32>
    %22 = arith.mulf %20, %21 : vector<1x256xf32>
    %cst_4 = arith.constant 1.000000e+00 : f32
    %23 = vector.broadcast %cst_4 : f32 to vector<1x256xf32>
    %24 = arith.subf %23, %22 : vector<1x256xf32>
    %c0_5 = arith.constant 0 : index
    %c0_6 = arith.constant 0 : index
    %c0_7 = arith.constant 0 : index
    %25 = vector.load %arg5[%c0_5, %c0_6, %c0_7] : memref<1x1x256xf32, #tpu.memory_space<vmem>>, vector<1x1x256xf32>
    %26 = vector.shape_cast %25 : vector<1x1x256xf32> to vector<1x256xf32>
    %27 = vector.shape_cast %24 : vector<1x256xf32> to vector<1x1x256xf32>
    tpu.vector_store %arg5[%c0_5, %c0_6, %c0_7], %27 {strides = array<i32>} : memref<1x1x256xf32, #tpu.memory_space<vmem>>, vector<1x1x256xf32>,
    %c0_8 = arith.constant 0 : index
    %c0_9 = arith.constant 0 : index
    %c0_10 = arith.constant 0 : index
    %28 = vector.load %arg6[%c0_8, %c0_9, %c0_10] : memref<1x1x256xi32, #tpu.memory_space<vmem>>, vector<1x1x256xi32>
    %29 = vector.shape_cast %28 : vector<1x1x256xi32> to vector<1x256xi32>
    %30 = vector.shape_cast %18 : vector<1x256xi32> to vector<1x1x256xi32>
    tpu.vector_store %arg6[%c0_8, %c0_9, %c0_10], %30 {strides = array<i32>} : memref<1x1x256xi32, #tpu.memory_space<vmem>>, vector<1x1x256xi32>,
    %c0_11 = arith.constant 0 : index
    %c0_12 = arith.constant 0 : index
    %c0_13 = arith.constant 0 : index
    %31 = vector.load %arg4[%c0_11, %c0_12, %c0_13] : memref<1x256x4xf32, #tpu.memory_space<vmem>>, vector<1x256x4xf32>
    %32 = vector.shape_cast %31 : vector<1x256x4xf32> to vector<256x4xf32>
    %33 = arith.index_cast %arg0 : i32 to index
    %c0_14 = arith.constant 0 : index
    %34 = memref.load %arg2[%33, %c0_14] : memref<2x2xf32, #tpu.memory_space<smem>>
    %35 = arith.index_cast %arg0 : i32 to index
    %c1 = arith.constant 1 : index
    %36 = memref.load %arg2[%35, %c1] : memref<2x2xf32, #tpu.memory_space<smem>>
    %37 = vector.extract_strided_slice %32 {offsets = [0, 0], sizes = [256, 2], strides = [1, 1]} : vector<256x4xf32> to vector<256x2xf32>
    %38 = vector.extract_strided_slice %32 {offsets = [0, 2], sizes = [256, 2], strides = [1, 1]} : vector<256x4xf32> to vector<256x2xf32>
    %cst_15 = arith.constant 5.000000e-01 : f32
    %39 = vector.broadcast %cst_15 : f32 to vector<256x2xf32>
    %40 = arith.mulf %39, %38 : vector<256x2xf32>
    %41 = tpu.iota {dimensions = array<i32: 1>} : vector<256x2xi32>
    %c0_i32 = arith.constant 0 : i32
    %42 = vector.broadcast %c0_i32 : i32 to vector<256x2xi32>
    %43 = arith.cmpi eq, %41, %42 : vector<256x2xi32>
    %44 = vector.broadcast %36 : f32 to vector<256x2xf32>
    %45 = vector.broadcast %34 : f32 to vector<256x2xf32>
    %46 = arith.select %43, %44, %45 : vector<256x2xi1>, vector<256x2xf32>
    %47 = arith.subf %37, %40 : vector<256x2xf32>
    %48 = arith.mulf %47, %46 : vector<256x2xf32>
    %c0_16 = arith.constant 0 : index
    %c0_17 = arith.constant 0 : index
    %c0_18 = arith.constant 0 : index
    %49 = vector.load %arg7[%c0_16, %c0_17, %c0_18] : memref<1x256x4xf32, #tpu.memory_space<vmem>>, vector<1x256x2xf32>
    %50 = vector.shape_cast %49 : vector<1x256x2xf32> to vector<256x2xf32>
    %51 = vector.shape_cast %48 : vector<256x2xf32> to vector<1x256x2xf32>
    tpu.vector_store %arg7[%c0_16, %c0_17, %c0_18], %51 {strides = array<i32>} : memref<1x256x4xf32, #tpu.memory_space<vmem>>, vector<1x256x2xf32>,
    %52 = arith.addf %37, %40 : vector<256x2xf32>
    %53 = arith.mulf %52, %46 : vector<256x2xf32>
    %c0_19 = arith.constant 0 : index
    %c0_20 = arith.constant 0 : index
    %c2 = arith.constant 2 : index
    %54 = vector.load %arg7[%c0_19, %c0_20, %c2] : memref<1x256x4xf32, #tpu.memory_space<vmem>>, vector<1x256x2xf32>
    %55 = vector.shape_cast %54 : vector<1x256x2xf32> to vector<256x2xf32>
    %56 = vector.shape_cast %53 : vector<256x2xf32> to vector<1x256x2xf32>
    tpu.vector_store %arg7[%c0_19, %c0_20, %c2], %56 {strides = array<i32>} : memref<1x256x4xf32, #tpu.memory_space<vmem>>, vector<1x256x2xf32>,
    return
  }
  func.func @transform_0(%arg0: i32, %arg1: i32) -> (i32, i32) {
    %c0_i32 = arith.constant 0 : i32
    %c0_i32_0 = arith.constant 0 : i32
    %c0_i32_1 = arith.constant 0 : i32
    return %c0_i32, %c0_i32_0 : i32, i32
  }
  func.func @transform_1(%arg0: i32, %arg1: i32) -> (i32, i32, i32) {
    %c0_i32 = arith.constant 0 : i32
    %c0_i32_0 = arith.constant 0 : i32
    return %arg0, %c0_i32, %arg1 : i32, i32, i32
  }
  func.func @transform_2(%arg0: i32, %arg1: i32) -> (i32, i32, i32) {
    %c0_i32 = arith.constant 0 : i32
    %c0_i32_0 = arith.constant 0 : i32
    return %arg0, %arg1, %c0_i32 : i32, i32, i32
  }
  func.func @transform_3(%arg0: i32, %arg1: i32) -> (i32, i32, i32) {
    %c0_i32 = arith.constant 0 : i32
    %c0_i32_0 = arith.constant 0 : i32
    return %arg0, %c0_i32, %arg1 : i32, i32, i32
  }
  func.func @transform_4(%arg0: i32, %arg1: i32) -> (i32, i32, i32) {
    %c0_i32 = arith.constant 0 : i32
    %c0_i32_0 = arith.constant 0 : i32
    return %arg0, %c0_i32, %arg1 : i32, i32, i32
  }
  func.func @transform_5(%arg0: i32, %arg1: i32) -> (i32, i32, i32) {
    %c0_i32 = arith.constant 0 : i32
    %c0_i32_0 = arith.constant 0 : i32
    return %arg0, %arg1, %c0_i32 : i32, i32, i32
  }
}

</mosaic_0001>

<llo_original>
// kernel: tpu_custom_call.1
$region0: #{tpu_custom_call.1}
  #allocation0 [shape = 'u32[]', space=smem, size = 0x4, offset = 0x4, fixed_abs, tag = 'smem constant byte address 0x4 - core index']
  #allocation1 [shape = 'u32[144,128]{1,0:T(1,128)}', space=vmem, size = 0x12000, scoped, tag = 'internal scratch']
  %s0 = inlined_call_operand.vmem [shape: f32[2,2], index: 0, kind: input, shape index: {}]
  %s1 = inlined_call_operand.vmem [shape: f32[2,32,256], index: 1, kind: input, shape index: {}]
  %s2 = inlined_call_operand.vmem [shape: f32[2,256,4], index: 2, kind: input, shape index: {}]
  %s3 = inlined_call_operand.hbm [shape: f32[2,1,256], index: 3, kind: output, shape index: {0}]
  %s4 = inlined_call_operand.hbm [shape: s32[2,1,256], index: 4, kind: output, shape index: {1}]
  %s5 = inlined_call_operand.vmem [shape: f32[2,256,4], index: 5, kind: output, shape index: {2}]
  %6 = xla_tuple %s3, %s4, %s5
  %s7 = sld [smem:[#allocation0]]
  $region65: #{tpu_custom_call.1} parent=0
    _
  %s9 = ssub.s32 1, %s7
  %s10 = scalar_select 0, %s9, %s7
  $region1: #{tpu_custom_call.1} parent=0
    #allocation2 [shape = 'u8[1024]{0}', space=smem, size = 0x400, scoped, tag = 'input window, operand 0, single buffered']
    #allocation3 [shape = 's32[2]{0}', space=sflag, size = 0x8, scoped, tag = 'scoped memory for tpu_custom_call.1']
    #allocation4 [shape = 's32[2]{0}', space=sflag, size = 0x8, scoped, tag = 'scoped memory for tpu_custom_call.1']
    #allocation5 [shape = 'u8[2048]{0}', space=vmem, size = 0x800, scoped, tag = 'output window, operand 0']
    #allocation6 [shape = 'u8[2048]{0}', space=vmem, size = 0x800, scoped, tag = 'output window, operand 1']
    #allocation7 [shape = 's32[2]{0}', space=sflag, size = 0x8, scoped, tag = 'scoped memory for tpu_custom_call.1']
    %11 = vsyncpa [#allocation4], 0
    %12 = vsyncpa [#allocation3], 0
    %s13 = scalar_lea.sflag [#allocation3], 1
    %14 = vsyncpa %s13, 0
    %15 = vsyncpa [#allocation7], 0
    %s16 = scalar_lea.sflag [#allocation7], 1
    %17 = vsyncpa %s16, 0
    loop: start=0, step=1, limit=4
    $region2: #{tpu_custom_call.1} parent=1 // loop_pre_header
      _
    $region3: #{tpu_custom_call.1} parent=1 // loop_header
      %s19 = sphi 0, %s23
      %p20 = scmp.ge.s32.totalorder %s19, 4
      %s26 = sphi 0, %s38
      %s27 = sphi 0, %s34
      %s28 = sphi 0, %s26
      %s29 = sphi 0, %s27
      %s30 = sphi 0, %s28
      %s31 = sphi 0, %s29
      %s39 = sphi 0, %s39
      %s41 = sphi 0, %s39
      %s42 = sphi 0, %s41
      %s56 = sphi 0, %s42
      %s64 = sphi 0, %s66
      %s67 = sphi 0, %s64
      %s68 = sphi 0, %s67
      %s84 = sphi 0, %s68
      %s92 = sphi 0, %s94
      %s95 = sphi 0, %s92
      %s96 = sphi 0, %s95
      %s112 = sphi 0, %s96
      %s120 = sphi 0, %s122
      %s123 = sphi 0, %s120
      %s124 = sphi 0, %s123
      %s140 = sphi 0, %s124
      %s148 = sphi 0, %s150
      %s151 = sphi 0, %s148
      %s152 = sphi 0, %s151
      %s168 = sphi 0, %s152
      %s176 = sphi 0, %s178
      %s179 = sphi 0, %s176
      %s180 = sphi 0, %s179
      %s196 = sphi 0, %s180
    $region4: #{tpu_custom_call.1} parent=1 // loop_header_branch
      %22 = sbr.rel (%p20) target = $region8
    $region5: #{tpu_custom_call.1} parent=1 // loop_body
      %s24 = ssub.s32 %s19, 1
      %s25 = ssub.s32 %s19, 2
      %s32 = sadd.s32 1, %s27
      %p33 = scmp.ge.s32.totalorder %s32, 1
      %s34 = scalar_select %p33, 0, %s32
      %s35 = sadd.s32 1, %s26
      %s36 = scalar_select %p33, %s35, %s26
      %p37 = scmp.ge.s32.totalorder %s36, 2
      %s38 = scalar_select %p37, 0, %s36
      %s40 = sadd.s32 %s39, 1
      %p43 = scmp.eq.s32.totalorder %s19, 1
      %p44 = scmp.ne.s32.totalorder %s39, %s41
      %p45 = scmp.eq.s32.totalorder %s19, 0
      %p46 = por %p44, %p45
      %p47 = scmp.ne.s32.totalorder %s39, %s41
      %p48 = scmp.eq.s32.totalorder %s24, 1
      %p49 = por %p47, %p48
      %p50 = scmp.ne.s32.totalorder %s41, %s42
      %p51 = scmp.eq.s32.totalorder %s24, 0
      %p52 = por %p50, %p51
      %p53 = scmp.ne.s32.totalorder %s41, %s42
      %p54 = scmp.eq.s32.totalorder %s25, 1
      %p55 = por %p53, %p54
      %p57 = scmp.ne.s32.totalorder %s42, %s56
      %p58 = scmp.eq.s32.totalorder %s25, 0
      %p59 = por %p57, %p58
      %s60 = ssub.s32 %s26, %s38
      %s61 = ssub.s32 %s27, %s34
      %s62 = sor.u32 %s60, %s61
      %p63 = scmp.eq.s32.totalorder %s62, 0
      %s65 = sadd.s32 %s64, 1
      %s66 = scalar_select %p63, %s64, %s65
      %p69 = pneg %p63
      %p70 = scmp.eq.s32.totalorder %s19, 1
      %p71 = por %p69, %p70
      %p72 = scmp.ne.s32.totalorder %s64, %s67
      %p73 = scmp.eq.s32.totalorder %s19, 0
      %p74 = por %p72, %p73
      %p75 = scmp.ne.s32.totalorder %s64, %s67
      %p76 = scmp.eq.s32.totalorder %s24, 1
      %p77 = por %p75, %p76
      %p78 = scmp.ne.s32.totalorder %s67, %s68
      %p79 = scmp.eq.s32.totalorder %s24, 0
      %p80 = por %p78, %p79
      %p81 = scmp.ne.s32.totalorder %s67, %s68
      %p82 = scmp.eq.s32.totalorder %s25, 1
      %p83 = por %p81, %p82
      %p85 = scmp.ne.s32.totalorder %s68, %s84
      %p86 = scmp.eq.s32.totalorder %s25, 0
      %p87 = por %p85, %p86
      %s88 = ssub.s32 %s26, %s38
      %s89 = ssub.s32 %s27, %s34
      %s90 = sor.u32 %s88, %s89
      %p91 = scmp.eq.s32.totalorder %s90, 0
      %s93 = sadd.s32 %s92, 1
      %s94 = scalar_select %p91, %s92, %s93
      %p97 = pneg %p91
      %p98 = scmp.eq.s32.totalorder %s19, 1
      %p99 = por %p97, %p98
      %p100 = scmp.ne.s32.totalorder %s92, %s95
      %p101 = scmp.eq.s32.totalorder %s19, 0
      %p102 = por %p100, %p101
      %p103 = scmp.ne.s32.totalorder %s92, %s95
      %p104 = scmp.eq.s32.totalorder %s24, 1
      %p105 = por %p103, %p104
      %p106 = scmp.ne.s32.totalorder %s95, %s96
      %p107 = scmp.eq.s32.totalorder %s24, 0
      %p108 = por %p106, %p107
      %p109 = scmp.ne.s32.totalorder %s95, %s96
      %p110 = scmp.eq.s32.totalorder %s25, 1
      %p111 = por %p109, %p110
      %p113 = scmp.ne.s32.totalorder %s96, %s112
      %p114 = scmp.eq.s32.totalorder %s25, 0
      %p115 = por %p113, %p114
      %s116 = ssub.s32 %s26, %s38
      %s117 = ssub.s32 %s27, %s34
      %s118 = sor.u32 %s116, %s117
      %p119 = scmp.eq.s32.totalorder %s118, 0
      %s121 = sadd.s32 %s120, 1
      %s122 = scalar_select %p119, %s120, %s121
      %p125 = pneg %p119
      %p126 = scmp.eq.s32.totalorder %s19, 1
      %p127 = por %p125, %p126
      %p128 = scmp.ne.s32.totalorder %s120, %s123
      %p129 = scmp.eq.s32.totalorder %s19, 0
      %p130 = por %p128, %p129
      %p131 = scmp.ne.s32.totalorder %s120, %s123
      %p132 = scmp.eq.s32.totalorder %s24, 1
      %p133 = por %p131, %p132
      %p134 = scmp.ne.s32.totalorder %s123, %s124
      %p135 = scmp.eq.s32.totalorder %s24, 0
      %p136 = por %p134, %p135
      %p137 = scmp.ne.s32.totalorder %s123, %s124
      %p138 = scmp.eq.s32.totalorder %s25, 1
      %p139 = por %p137, %p138
      %p141 = scmp.ne.s32.totalorder %s124, %s140
      %p142 = scmp.eq.s32.totalorder %s25, 0
      %p143 = por %p141, %p142
      %s144 = ssub.s32 %s26, %s38
      %s145 = ssub.s32 %s27, %s34
      %s146 = sor.u32 %s144, %s145
      %p147 = scmp.eq.s32.totalorder %s146, 0
      %s149 = sadd.s32 %s148, 1
      %s150 = scalar_select %p147, %s148, %s149
      %p153 = pneg %p147
      %p154 = scmp.eq.s32.totalorder %s19, 1
      %p155 = por %p153, %p154
      %p156 = scmp.ne.s32.totalorder %s148, %s151
      %p157 = scmp.eq.s32.totalorder %s19, 0
      %p158 = por %p156, %p157
      %p159 = scmp.ne.s32.totalorder %s148, %s151
      %p160 = scmp.eq.s32.totalorder %s24, 1
      %p161 = por %p159, %p160
      %p162 = scmp.ne.s32.totalorder %s151, %s152
      %p163 = scmp.eq.s32.totalorder %s24, 0
      %p164 = por %p162, %p163
      %p165 = scmp.ne.s32.totalorder %s151, %s152
      %p166 = scmp.eq.s32.totalorder %s25, 1
      %p167 = por %p165, %p166
      %p169 = scmp.ne.s32.totalorder %s152, %s168
      %p170 = scmp.eq.s32.totalorder %s25, 0
      %p171 = por %p169, %p170
      %s172 = ssub.s32 %s26, %s38
      %s173 = ssub.s32 %s27, %s34
      %s174 = sor.u32 %s172, %s173
      %p175 = scmp.eq.s32.totalorder %s174, 0
      %s177 = sadd.s32 %s176, 1
      %s178 = scalar_select %p175, %s176, %s177
      %p181 = pneg %p175
      %p182 = scmp.eq.s32.totalorder %s19, 1
      %p183 = por %p181, %p182
      %p184 = scmp.ne.s32.totalorder %s176, %s179
      %p185 = scmp.eq.s32.totalorder %s19, 0
      %p186 = por %p184, %p185
      %p187 = scmp.ne.s32.totalorder %s176, %s179
      %p188 = scmp.eq.s32.totalorder %s24, 1
      %p189 = por %p187, %p188
      %p190 = scmp.ne.s32.totalorder %s179, %s180
      %p191 = scmp.eq.s32.totalorder %s24, 0
      %p192 = por %p190, %p191
      %p193 = scmp.ne.s32.totalorder %s179, %s180
      %p194 = scmp.eq.s32.totalorder %s25, 1
      %p195 = por %p193, %p194
      %p197 = scmp.ne.s32.totalorder %s180, %s196
      %p198 = scmp.eq.s32.totalorder %s25, 0
      %p199 = por %p197, %p198
      %p200 = scmp.le.s32.totalorder 1, %s19
      %p201 = scmp.lt.s32.totalorder %s19, 3
      %p202 = pnand %p200, %p201
      %p203 = pneg %p202
      // Predicated region
      $region9: #{tpu_custom_call.1} parent=5 // pred_check
        _
      $region10: #{tpu_custom_call.1} parent=5 // pred_check_branch
        %205 = sbr.rel (%p202) target = $region12
      $region11: #{tpu_custom_call.1} parent=5 // pred_region
        %s206 = ssub.s32 %s19, 1
        // Predicated region
        $region13: #{tpu_custom_call.1} parent=11 // pred_check
          %p207 = pneg %p52
        $region14: #{tpu_custom_call.1} parent=11 // pred_check_branch
          %209 = sbr.rel (%p207) target = $region16
        $region15: #{tpu_custom_call.1} parent=11 // pred_region
          %s211 = ssub.s32 32, 32
          %212 = vsyncadd [#allocation4], %s211
          %s214 = sshll.u32 %s0, 4
          %s215 = int_to_ptr.vmem [resolvable:$true] %s214
          %217 = dma.vmem_to_smem %s215, 32, [#allocation2], [#allocation4]
        $region16: #{tpu_custom_call.1} parent=11 // pred_fallthru
          _
      $region12: #{tpu_custom_call.1} parent=5 // pred_fallthru
        _
      %p218 = scmp.lt.s32.totalorder %s19, 2
      // Predicated region
      $region17: #{tpu_custom_call.1} parent=5 // pred_check
        %p219 = pneg %p218
      $region18: #{tpu_custom_call.1} parent=5 // pred_check_branch
        %221 = sbr.rel (%p219) target = $region20
      $region19: #{tpu_custom_call.1} parent=5 // pred_region
        // Predicated region
        $region21: #{tpu_custom_call.1} parent=19 // pred_check
          %p222 = pneg %p74
        $region22: #{tpu_custom_call.1} parent=19 // pred_check_branch
          %224 = sbr.rel (%p222) target = $region24
        $region23: #{tpu_custom_call.1} parent=19 // pred_region
          %s225 = smul.u32 2, %s27
          %p226 = scmp.lt.s32.totalorder %s26, 1
          %s227 = scalar_select %p226, %s26, 1
          %p228 = scmp.lt.s32.totalorder %s225, 1
          %s229 = scalar_select %p228, %s225, 1
          %s230 = smul.addr %s227, 8
          %s231 = sadd.s32 %s229, %s230
          %s232 = smul.addr %s231, 8
          %s233 = scalar_lea.vmem %s1, %s232
          %s234 = smul.u32 2, %s27
        $region24: #{tpu_custom_call.1} parent=19 // pred_fallthru
          _
        // Predicated region
        $region25: #{tpu_custom_call.1} parent=19 // pred_check
          %p235 = pneg %p102
        $region26: #{tpu_custom_call.1} parent=19 // pred_check_branch
          %237 = sbr.rel (%p235) target = $region28
        $region27: #{tpu_custom_call.1} parent=19 // pred_region
          %s238 = smul.u32 32, %s27
          %p239 = scmp.lt.s32.totalorder %s26, 1
          %s240 = scalar_select %p239, %s26, 1
          %p241 = scmp.lt.s32.totalorder %s238, 31
          %s242 = scalar_select %p241, %s238, 31
          %s243 = smul.addr %s240, 32
          %s244 = sadd.s32 %s242, %s243
          %s245 = smul.addr %s244, 8
          %s246 = scalar_lea.vmem %s2, %s245
          %s247 = smul.u32 32, %s27
        $region28: #{tpu_custom_call.1} parent=19 // pred_fallthru
          _
      $region20: #{tpu_custom_call.1} parent=5 // pred_fallthru
        _
      %p248 = scmp.le.s32.totalorder 1, %s19
      %p249 = scmp.lt.s32.totalorder %s19, 3
      %p250 = pnand %p248, %p249
      %p251 = pneg %p250
      // Predicated region
      $region29: #{tpu_custom_call.1} parent=5 // pred_check
        _
      $region30: #{tpu_custom_call.1} parent=5 // pred_check_branch
        %253 = sbr.rel (%p250) target = $region32
      $region31: #{tpu_custom_call.1} parent=5 // pred_region
        %s254 = ssub.s32 %s19, 1
        // Predicated region
        $region33: #{tpu_custom_call.1} parent=31 // pred_check
          %p255 = pneg %p52
        $region34: #{tpu_custom_call.1} parent=31 // pred_check_branch
          %257 = sbr.rel (%p255) target = $region36
        $region35: #{tpu_custom_call.1} parent=31 // pred_region
          %258 = dma.done [#allocation4], 32
        $region36: #{tpu_custom_call.1} parent=31 // pred_fallthru
          _
        %259 = sfence
        %p260 = pneg %p52
        %p261 = pneg %p49
        %s262 = smul.u32 2, %s29
        %p263 = scmp.lt.s32.totalorder %s28, 1
        %s264 = scalar_select %p263, %s28, 1
        %p265 = scmp.lt.s32.totalorder %s262, 1
        %s266 = scalar_select %p265, %s262, 1
        %s267 = smul.addr %s264, 8
        %s268 = sadd.s32 %s266, %s267
        %s269 = smul.addr %s268, 8
        %s270 = scalar_lea.vmem %s1, %s269
        %p271 = pneg %p80
        %p272 = pneg %p77
        %s273 = smul.u32 32, %s29
        %p274 = scmp.lt.s32.totalorder %s28, 1
        %s275 = scalar_select %p274, %s28, 1
        %p276 = scmp.lt.s32.totalorder %s273, 31
        %s277 = scalar_select %p276, %s273, 31
        %s278 = smul.addr %s275, 32
        %s279 = sadd.s32 %s277, %s278
        %s280 = smul.addr %s279, 8
        %s281 = scalar_lea.vmem %s2, %s280
        %p282 = pneg %p108
        %p283 = pneg %p105
        %p284 = pneg %p136
        %p285 = pneg %p133
        %s286 = sand.u32 %s123, 1
        %s287 = scalar_lea.sflag [#allocation3], %s286
        %s288 = sand.u32 %s123, 1
        %s289 = smul.addr %s288, 2
        %s290 = scalar_lea.vmem [#allocation5], %s289
        %p291 = pneg %p164
        %p292 = pneg %p161
        %s293 = sand.u32 %s151, 1
        %s294 = scalar_lea.sflag [#allocation7], %s293
        %s295 = sand.u32 %s151, 1
        %s296 = smul.addr %s295, 2
        %s297 = scalar_lea.vmem [#allocation6], %s296
        %p298 = pneg %p192
        %p299 = pneg %p189
        %s300 = smul.u32 32, %s29
        %p301 = scmp.lt.s32.totalorder %s28, 1
        %s302 = scalar_select %p301, %s28, 1
        %p303 = scmp.lt.s32.totalorder %s300, 31
        %s304 = scalar_select %p303, %s300, 31
        %s305 = smul.addr %s302, 32
        %s306 = sadd.s32 %s304, %s305
        %s307 = smul.addr %s306, 8
        %s308 = scalar_lea.vmem %s5, %s307
        %s309 = smul.u32 2, %s29
        %p310 = scmp.lt.s32.totalorder %s28, 1
        %s311 = scalar_select %p310, %s28, 1
        %p312 = scmp.lt.s32.totalorder %s309, 1
        %s313 = scalar_select %p312, %s309, 1
        %s314 = smul.addr %s311, 8
        %s315 = sadd.s32 %s313, %s314
        %s316 = smul.addr %s315, 8
        %s317 = scalar_lea.vmem %s1, %s316
        %s318 = smul.u32 2, %s29
        %s319 = smul.u32 32, %s29
        %p320 = scmp.lt.s32.totalorder %s28, 1
        %s321 = scalar_select %p320, %s28, 1
        %p322 = scmp.lt.s32.totalorder %s319, 31
        %s323 = scalar_select %p322, %s319, 31
        %s324 = smul.addr %s321, 32
        %s325 = sadd.s32 %s323, %s324
        %s326 = smul.addr %s325, 8
        %s327 = scalar_lea.vmem %s2, %s326
        %s328 = smul.u32 32, %s29
        %s329 = smul.u32 2, %s29
        %s330 = smul.u32 2, %s29
        %s331 = smul.u32 32, %s29
        %p332 = scmp.lt.s32.totalorder %s28, 1
        %s333 = scalar_select %p332, %s28, 1
        %p334 = scmp.lt.s32.totalorder %s331, 31
        %s335 = scalar_select %p334, %s331, 31
        %s336 = smul.addr %s333, 32
        %s337 = sadd.s32 %s335, %s336
        %s338 = smul.addr %s337, 8
        %s339 = scalar_lea.vmem %s5, %s338
        %s340 = smul.u32 32, %s29
        %v341 = vld [vmem:[%s317] sm:$0xff]
        %v342 = vld [vmem:[%s317 + $0x8] sm:$0xff]
        %v343 = vld [vmem:[%s317 + $0x10] sm:$0xff]
        %v344 = vld [vmem:[%s317 + $0x18] sm:$0xff]
        %v345 = vld [vmem:[%s317 + $0x20] sm:$0xff]
        %v346 = vld [vmem:[%s317 + $0x28] sm:$0xff]
        %v347 = vld [vmem:[%s317 + $0x30] sm:$0xff]
        %v348 = vld [vmem:[%s317 + $0x38] sm:$0xff]
        %v349 = vmax.f32 %v341, %v345
        %vm350 = vcmask 1046528
        %v351 = vsel %vm350, %v347, -inf
        %v352 = vmax.f32 %v343, %v351
        %v353 = vmax.f32 %v349, %v352
        %v354 = vrot.slane %v353, 4
        %v355 = vmax.f32 %v353, %v354
        %v356 = vrot.slane %v355, 2
        %v357 = vmax.f32 %v355, %v356
        %v358 = vrot.slane %v357, 1
        %v359 = vmax.f32 %v357, %v358
        %v360 = vmax.f32 %v342, %v346
        %v361 = vsel %vm350, %v348, -inf
        %v362 = vmax.f32 %v344, %v361
        %v363 = vmax.f32 %v360, %v362
        %v364 = vrot.slane %v363, 4
        %v365 = vmax.f32 %v363, %v364
        %v366 = vrot.slane %v365, 2
        %v367 = vmax.f32 %v365, %v366
        %v368 = vrot.slane %v367, 1
        %v369 = vmax.f32 %v367, %v368
        %v370 = vmax.f32 %v359, %v347
        %v371 = vmax.f32 %v369, %v348
        %v372 = vlaneseq
        %v373 = vshrl.u32 %v372, 7
        %v374 = vsub.s32 7, %v373
        %v375 = vrot.slane %v370, %v374
        %v376 = vlaneseq
        %v377 = vshrl.u32 %v376, 7
        %v378 = vsub.s32 7, %v377
        %v379 = vrot.slane %v371, %v378
        %v380 = vsub.f32 %v341, %v375
        %v381 = vsub.f32 %v342, %v379
        %v382 = vsub.f32 %v343, %v375
        %v383 = vsub.f32 %v344, %v379
        %v384 = vsub.f32 %v345, %v375
        %v385 = vsub.f32 %v346, %v379
        %v386 = vsub.f32 %v347, %v375
        %v387 = vsub.f32 %v348, %v379
        %v388 = vmul.f32 %v380, 1.442695
        %v389 = vpow.pop %v388
        %v390 = vmul.f32 %v381, 1.442695
        %v391 = vpow.pop %v390
        %v392 = vmul.f32 %v382, 1.442695
        %v393 = vpow.pop %v392
        %v394 = vmul.f32 %v383, 1.442695
        %v395 = vpow.pop %v394
        %v396 = vmul.f32 %v384, 1.442695
        %v397 = vpow.pop %v396
        %v398 = vmul.f32 %v385, 1.442695
        %v399 = vpow.pop %v398
        %v400 = vmul.f32 %v386, 1.442695
        %v401 = vpow.pop %v400
        %v402 = vmul.f32 %v387, 1.442695
        %v403 = vpow.pop %v402
        %v404 = vadd.f32 %v389, %v393
        %v405 = vadd.f32 %v404, %v397
        %v406 = vadd.f32 %v405, %v401
        %v407 = vrot.slane %v406, 4
        %v408 = vadd.f32 %v406, %v407
        %v409 = vrot.slane %v408, 2
        %v410 = vadd.f32 %v408, %v409
        %v411 = vrot.slane %v410, 1
        %v412 = vadd.f32 %v410, %v411
        %v413 = vadd.f32 %v391, %v395
        %v414 = vadd.f32 %v413, %v399
        %v415 = vadd.f32 %v414, %v403
        %v416 = vrot.slane %v415, 4
        %v417 = vadd.f32 %v415, %v416
        %v418 = vrot.slane %v417, 2
        %v419 = vadd.f32 %v417, %v418
        %v420 = vrot.slane %v419, 1
        %v421 = vadd.f32 %v419, %v420
        %v422 = vlaneseq
        %v423 = vshrl.u32 %v422, 7
        %v424 = vadd.s32 %v423, 8
        %v425 = vadd.s32 %v423, 16
        %v426 = vadd.s32 %v423, 24
        %vm427 = vcmp.eq.f32.partialorder %v341, %v359
        %vm428 = vcmp.eq.f32.partialorder %v342, %v369
        %vm429 = vcmp.eq.f32.partialorder %v343, %v359
        %vm430 = vcmp.eq.f32.partialorder %v344, %v369
        %vm431 = vcmp.eq.f32.partialorder %v345, %v359
        %vm432 = vcmp.eq.f32.partialorder %v346, %v369
        %vm433 = vcmp.eq.f32.partialorder %v347, %v359
        %vm434 = vcmp.eq.f32.partialorder %v348, %v369
        %v435 = vsel %vm427, %v423, 32
        %v436 = vsel %vm428, %v423, 32
        %v437 = vsel %vm429, %v424, 32
        %v438 = vsel %vm430, %v424, 32
        %v439 = vsel %vm431, %v425, 32
        %v440 = vsel %vm432, %v425, 32
        %v441 = vsel %vm433, %v426, 32
        %v442 = vsel %vm434, %v426, 32
        %vm443 = vcmp.lt.s32.totalorder %v435, %v439
        %v444 = vsel %vm443, %v435, %v439
        %v445 = vsel %vm350, %v441, 2147483647
        %vm446 = vcmp.lt.s32.totalorder %v437, %v445
        %v447 = vsel %vm446, %v437, %v445
        %vm448 = vcmp.lt.s32.totalorder %v444, %v447
        %v449 = vsel %vm448, %v444, %v447
        %v450 = vrot.slane %v449, 4
        %vm451 = vcmp.lt.s32.totalorder %v449, %v450
        %v452 = vsel %vm451, %v449, %v450
        %v453 = vrot.slane %v452, 2
        %vm454 = vcmp.lt.s32.totalorder %v452, %v453
        %v455 = vsel %vm454, %v452, %v453
        %v456 = vrot.slane %v455, 1
        %vm457 = vcmp.lt.s32.totalorder %v455, %v456
        %v458 = vsel %vm457, %v455, %v456
        %vm459 = vcmp.lt.s32.totalorder %v436, %v440
        %v460 = vsel %vm459, %v436, %v440
        %v461 = vsel %vm350, %v442, 2147483647
        %vm462 = vcmp.lt.s32.totalorder %v438, %v461
        %v463 = vsel %vm462, %v438, %v461
        %vm464 = vcmp.lt.s32.totalorder %v460, %v463
        %v465 = vsel %vm464, %v460, %v463
        %v466 = vrot.slane %v465, 4
        %vm467 = vcmp.lt.s32.totalorder %v465, %v466
        %v468 = vsel %vm467, %v465, %v466
        %v469 = vrot.slane %v468, 2
        %vm470 = vcmp.lt.s32.totalorder %v468, %v469
        %v471 = vsel %vm470, %v468, %v469
        %v472 = vrot.slane %v471, 1
        %vm473 = vcmp.lt.s32.totalorder %v471, %v472
        %v474 = vsel %vm473, %v471, %v472
        %v475 = vsub.f32 %v359, %v370
        %v476 = vsub.f32 %v369, %v371
        %v477 = vmul.f32 %v475, 1.442695
        %v478 = vpow.pop %v477
        %v479 = vmul.f32 %v476, 1.442695
        %v480 = vpow.pop %v479
        %v481 = vrcp.pop %v412
        %v482 = vrcp.pop %v421
        %v483 = vmul.f32 %v478, %v481
        %v484 = vmul.f32 %v480, %v482
        %v485 = vsub.f32 1.0, %v483
        %v486 = vsub.f32 1.0, %v484
        %v489 = vcombine.high %v485, %v486
        %v491 = vunpack.c.l.s4 1966171168
        %v492 = vunpack.c.0.s8 %v491
        %v493 = vlaneseq
        %v494 = vshrl.u32 %v493, 7
        %v495 = vsub.s32 %v492, %v494
        %v496 = vrot.slane %v489, %v495
        %v497 = vcombine.high %v496, %v496
        %v499 = vunpack.c.l.s4 1966171168
        %v500 = vunpack.c.0.s8 %v499
        %v501 = vlaneseq
        %v502 = vshrl.u32 %v501, 7
        %v503 = vsub.s32 %v500, %v502
        %v504 = vrot.slane %v497, %v503
        %v505 = vcombine.high %v504, %v504
        %v507 = vlaneseq
        %vm508 = vcmp.ge.s32.totalorder %v507, 0
        %vm509 = vcmp.lt.s32.totalorder %v507, 256
        %vm510 = vmand %vm508, %vm509
        %511 = vst.msk [vmem:[%s290] sm:$0x3] %vm510, %v505
        %v512 = vcombine.low %v458, %v474
        %v514 = vunpack.c.l.s4 1966171168
        %v515 = vunpack.c.0.s8 %v514
        %v516 = vlaneseq
        %v517 = vshrl.u32 %v516, 7
        %v518 = vsub.s32 %v515, %v517
        %v519 = vrot.slane %v512, %v518
        %v521 = vunpack.c.l.s4 1966171168
        %v522 = vunpack.c.0.s8 %v521
        %v523 = vlaneseq
        %v524 = vshrl.u32 %v523, 7
        %v525 = vsub.s32 %v522, %v524
        %v526 = vrot.slane %v519, %v525
        %527 = vst.msk [vmem:[%s297] sm:$0x3] %vm510, %v526
        %v528 = vld [vmem:[%s327] sm:$0xff]
        %v529 = vld [vmem:[%s327 + $0x8] sm:$0xff]
        %v530 = vld [vmem:[%s327 + $0x10] sm:$0xff]
        %v531 = vld [vmem:[%s327 + $0x18] sm:$0xff]
        %v532 = vld [vmem:[%s327 + $0x20] sm:$0xff]
        %v533 = vld [vmem:[%s327 + $0x28] sm:$0xff]
        %v534 = vld [vmem:[%s327 + $0x30] sm:$0xff]
        %v535 = vld [vmem:[%s327 + $0x38] sm:$0xff]
        %v536 = vld [vmem:[%s327 + $0x40] sm:$0xff]
        %v537 = vld [vmem:[%s327 + $0x48] sm:$0xff]
        %v538 = vld [vmem:[%s327 + $0x50] sm:$0xff]
        %v539 = vld [vmem:[%s327 + $0x58] sm:$0xff]
        %v540 = vld [vmem:[%s327 + $0x60] sm:$0xff]
        %v541 = vld [vmem:[%s327 + $0x68] sm:$0xff]
        %v542 = vld [vmem:[%s327 + $0x70] sm:$0xff]
        %v543 = vld [vmem:[%s327 + $0x78] sm:$0xff]
        %v544 = vld [vmem:[%s327 + $0x80] sm:$0xff]
        %v545 = vld [vmem:[%s327 + $0x88] sm:$0xff]
        %v546 = vld [vmem:[%s327 + $0x90] sm:$0xff]
        %v547 = vld [vmem:[%s327 + $0x98] sm:$0xff]
        %v548 = vld [vmem:[%s327 + $0xa0] sm:$0xff]
        %v549 = vld [vmem:[%s327 + $0xa8] sm:$0xff]
        %v550 = vld [vmem:[%s327 + $0xb0] sm:$0xff]
        %v551 = vld [vmem:[%s327 + $0xb8] sm:$0xff]
        %v552 = vld [vmem:[%s327 + $0xc0] sm:$0xff]
        %v553 = vld [vmem:[%s327 + $0xc8] sm:$0xff]
        %v554 = vld [vmem:[%s327 + $0xd0] sm:$0xff]
        %v555 = vld [vmem:[%s327 + $0xd8] sm:$0xff]
        %v556 = vld [vmem:[%s327 + $0xe0] sm:$0xff]
        %v557 = vld [vmem:[%s327 + $0xe8] sm:$0xff]
        %v558 = vld [vmem:[%s327 + $0xf0] sm:$0xff]
        %v559 = vld [vmem:[%s327 + $0xf8] sm:$0xff]
        %s560 = smul.u32 %s28, 128
        %s561 = sld [smem:[#allocation2 + %s560]]
        %s562 = sadd.s32 %s560, 1
        %s563 = sld [smem:[#allocation2 + %s562]]
        %v564 = vmul.f32 %v528, 0.5
        %v565 = vmul.f32 %v529, 0.5
        %v566 = vmul.f32 %v530, 0.5
        %v567 = vmul.f32 %v531, 0.5
        %v568 = vmul.f32 %v532, 0.5
        %v569 = vmul.f32 %v533, 0.5
        %v570 = vmul.f32 %v534, 0.5
        %v571 = vmul.f32 %v535, 0.5
        %v572 = vmul.f32 %v536, 0.5
        %v573 = vmul.f32 %v537, 0.5
        %v574 = vmul.f32 %v538, 0.5
        %v575 = vmul.f32 %v539, 0.5
        %v576 = vmul.f32 %v540, 0.5
        %v577 = vmul.f32 %v541, 0.5
        %v578 = vmul.f32 %v542, 0.5
        %v579 = vmul.f32 %v543, 0.5
        %v580 = vmul.f32 %v544, 0.5
        %v581 = vmul.f32 %v545, 0.5
        %v582 = vmul.f32 %v546, 0.5
        %v583 = vmul.f32 %v547, 0.5
        %v584 = vmul.f32 %v548, 0.5
        %v585 = vmul.f32 %v549, 0.5
        %v586 = vmul.f32 %v550, 0.5
        %v587 = vmul.f32 %v551, 0.5
        %v588 = vmul.f32 %v552, 0.5
        %v589 = vmul.f32 %v553, 0.5
        %v590 = vmul.f32 %v554, 0.5
        %v591 = vmul.f32 %v555, 0.5
        %v592 = vmul.f32 %v556, 0.5
        %v593 = vmul.f32 %v557, 0.5
        %v594 = vmul.f32 %v558, 0.5
        %v595 = vmul.f32 %v559, 0.5
        %v596 = vlaneseq
        %v597 = vand.u32 %v596, 127
        %vm598 = vcmp.eq.s32.totalorder %v597, 0
        %v599 = vstv %s563
        %v600 = vstv %s561
        %v601 = vsel %vm598, %v599, %v600
        %634 = vrot.lane.b32.xlu0 %v564, 126
        %v635 = vpop.permute.xlu0 %634
        %636 = vrot.lane.b32.xlu0 %v565, 126
        %v637 = vpop.permute.xlu0 %636
        %638 = vrot.lane.b32.xlu0 %v566, 126
        %v639 = vpop.permute.xlu0 %638
        %640 = vrot.lane.b32.xlu0 %v567, 126
        %v641 = vpop.permute.xlu0 %640
        %642 = vrot.lane.b32.xlu0 %v568, 126
        %v643 = vpop.permute.xlu0 %642
        %644 = vrot.lane.b32.xlu0 %v569, 126
        %v645 = vpop.permute.xlu0 %644
        %646 = vrot.lane.b32.xlu0 %v570, 126
        %v647 = vpop.permute.xlu0 %646
        %648 = vrot.lane.b32.xlu0 %v571, 126
        %v649 = vpop.permute.xlu0 %648
        %650 = vrot.lane.b32.xlu0 %v572, 126
        %v651 = vpop.permute.xlu0 %650
        %652 = vrot.lane.b32.xlu0 %v573, 126
        %v653 = vpop.permute.xlu0 %652
        %654 = vrot.lane.b32.xlu0 %v574, 126
        %v655 = vpop.permute.xlu0 %654
        %656 = vrot.lane.b32.xlu0 %v575, 126
        %v657 = vpop.permute.xlu0 %656
        %658 = vrot.lane.b32.xlu0 %v576, 126
        %v659 = vpop.permute.xlu0 %658
        %660 = vrot.lane.b32.xlu0 %v577, 126
        %v661 = vpop.permute.xlu0 %660
        %662 = vrot.lane.b32.xlu0 %v578, 126
        %v663 = vpop.permute.xlu0 %662
        %664 = vrot.lane.b32.xlu0 %v579, 126
        %v665 = vpop.permute.xlu0 %664
        %666 = vrot.lane.b32.xlu0 %v580, 126
        %v667 = vpop.permute.xlu0 %666
        %668 = vrot.lane.b32.xlu0 %v581, 126
        %v669 = vpop.permute.xlu0 %668
        %670 = vrot.lane.b32.xlu0 %v582, 126
        %v671 = vpop.permute.xlu0 %670
        %672 = vrot.lane.b32.xlu0 %v583, 126
        %v673 = vpop.permute.xlu0 %672
        %674 = vrot.lane.b32.xlu0 %v584, 126
        %v675 = vpop.permute.xlu0 %674
        %676 = vrot.lane.b32.xlu0 %v585, 126
        %v677 = vpop.permute.xlu0 %676
        %678 = vrot.lane.b32.xlu0 %v586, 126
        %v679 = vpop.permute.xlu0 %678
        %680 = vrot.lane.b32.xlu0 %v587, 126
        %v681 = vpop.permute.xlu0 %680
        %682 = vrot.lane.b32.xlu0 %v588, 126
        %v683 = vpop.permute.xlu0 %682
        %684 = vrot.lane.b32.xlu0 %v589, 126
        %v685 = vpop.permute.xlu0 %684
        %686 = vrot.lane.b32.xlu0 %v590, 126
        %v687 = vpop.permute.xlu0 %686
        %688 = vrot.lane.b32.xlu0 %v591, 126
        %v689 = vpop.permute.xlu0 %688
        %690 = vrot.lane.b32.xlu0 %v592, 126
        %v691 = vpop.permute.xlu0 %690
        %692 = vrot.lane.b32.xlu0 %v593, 126
        %v693 = vpop.permute.xlu0 %692
        %694 = vrot.lane.b32.xlu0 %v594, 126
        %v695 = vpop.permute.xlu0 %694
        %696 = vrot.lane.b32.xlu0 %v595, 126
        %v697 = vpop.permute.xlu0 %696
        %v730 = vsub.f32 %v528, %v635
        %v731 = vsub.f32 %v529, %v637
        %v732 = vsub.f32 %v530, %v639
        %v733 = vsub.f32 %v531, %v641
        %v734 = vsub.f32 %v532, %v643
        %v735 = vsub.f32 %v533, %v645
        %v736 = vsub.f32 %v534, %v647
        %v737 = vsub.f32 %v535, %v649
        %v738 = vsub.f32 %v536, %v651
        %v739 = vsub.f32 %v537, %v653
        %v740 = vsub.f32 %v538, %v655
        %v741 = vsub.f32 %v539, %v657
        %v742 = vsub.f32 %v540, %v659
        %v743 = vsub.f32 %v541, %v661
        %v744 = vsub.f32 %v542, %v663
        %v745 = vsub.f32 %v543, %v665
        %v746 = vsub.f32 %v544, %v667
        %v747 = vsub.f32 %v545, %v669
        %v748 = vsub.f32 %v546, %v671
        %v749 = vsub.f32 %v547, %v673
        %v750 = vsub.f32 %v548, %v675
        %v751 = vsub.f32 %v549, %v677
        %v752 = vsub.f32 %v550, %v679
        %v753 = vsub.f32 %v551, %v681
        %v754 = vsub.f32 %v552, %v683
        %v755 = vsub.f32 %v553, %v685
        %v756 = vsub.f32 %v554, %v687
        %v757 = vsub.f32 %v555, %v689
        %v758 = vsub.f32 %v556, %v691
        %v759 = vsub.f32 %v557, %v693
        %v760 = vsub.f32 %v558, %v695
        %v761 = vsub.f32 %v559, %v697
        %v762 = vmul.f32 %v730, %v601
        %v763 = vmul.f32 %v731, %v601
        %v764 = vmul.f32 %v732, %v601
        %v765 = vmul.f32 %v733, %v601
        %v766 = vmul.f32 %v734, %v601
        %v767 = vmul.f32 %v735, %v601
        %v768 = vmul.f32 %v736, %v601
        %v769 = vmul.f32 %v737, %v601
        %v770 = vmul.f32 %v738, %v601
        %v771 = vmul.f32 %v739, %v601
        %v772 = vmul.f32 %v740, %v601
        %v773 = vmul.f32 %v741, %v601
        %v774 = vmul.f32 %v742, %v601
        %v775 = vmul.f32 %v743, %v601
        %v776 = vmul.f32 %v744, %v601
        %v777 = vmul.f32 %v745, %v601
        %v778 = vmul.f32 %v746, %v601
        %v779 = vmul.f32 %v747, %v601
        %v780 = vmul.f32 %v748, %v601
        %v781 = vmul.f32 %v749, %v601
        %v782 = vmul.f32 %v750, %v601
        %v783 = vmul.f32 %v751, %v601
        %v784 = vmul.f32 %v752, %v601
        %v785 = vmul.f32 %v753, %v601
        %v786 = vmul.f32 %v754, %v601
        %v787 = vmul.f32 %v755, %v601
        %v788 = vmul.f32 %v756, %v601
        %v789 = vmul.f32 %v757, %v601
        %v790 = vmul.f32 %v758, %v601
        %v791 = vmul.f32 %v759, %v601
        %v792 = vmul.f32 %v760, %v601
        %v793 = vmul.f32 %v761, %v601
        %vm794 = vcmask 15360
        %795 = vst.msk [vmem:[%s339] sm:$0xff] %vm794, %v762
        %796 = vst.msk [vmem:[%s339 + $0x8] sm:$0xff] %vm794, %v763
        %797 = vst.msk [vmem:[%s339 + $0x10] sm:$0xff] %vm794, %v764
        %798 = vst.msk [vmem:[%s339 + $0x18] sm:$0xff] %vm794, %v765
        %799 = vst.msk [vmem:[%s339 + $0x20] sm:$0xff] %vm794, %v766
        %800 = vst.msk [vmem:[%s339 + $0x28] sm:$0xff] %vm794, %v767
        %801 = vst.msk [vmem:[%s339 + $0x30] sm:$0xff] %vm794, %v768
        %802 = vst.msk [vmem:[%s339 + $0x38] sm:$0xff] %vm794, %v769
        %803 = vst.msk [vmem:[%s339 + $0x40] sm:$0xff] %vm794, %v770
        %804 = vst.msk [vmem:[%s339 + $0x48] sm:$0xff] %vm794, %v771
        %805 = vst.msk [vmem:[%s339 + $0x50] sm:$0xff] %vm794, %v772
        %806 = vst.msk [vmem:[%s339 + $0x58] sm:$0xff] %vm794, %v773
        %807 = vst.msk [vmem:[%s339 + $0x60] sm:$0xff] %vm794, %v774
        %808 = vst.msk [vmem:[%s339 + $0x68] sm:$0xff] %vm794, %v775
        %809 = vst.msk [vmem:[%s339 + $0x70] sm:$0xff] %vm794, %v776
        %810 = vst.msk [vmem:[%s339 + $0x78] sm:$0xff] %vm794, %v777
        %811 = vst.msk [vmem:[%s339 + $0x80] sm:$0xff] %vm794, %v778
        %812 = vst.msk [vmem:[%s339 + $0x88] sm:$0xff] %vm794, %v779
        %813 = vst.msk [vmem:[%s339 + $0x90] sm:$0xff] %vm794, %v780
        %814 = vst.msk [vmem:[%s339 + $0x98] sm:$0xff] %vm794, %v781
        %815 = vst.msk [vmem:[%s339 + $0xa0] sm:$0xff] %vm794, %v782
        %816 = vst.msk [vmem:[%s339 + $0xa8] sm:$0xff] %vm794, %v783
        %817 = vst.msk [vmem:[%s339 + $0xb0] sm:$0xff] %vm794, %v784
        %818 = vst.msk [vmem:[%s339 + $0xb8] sm:$0xff] %vm794, %v785
        %819 = vst.msk [vmem:[%s339 + $0xc0] sm:$0xff] %vm794, %v786
        %820 = vst.msk [vmem:[%s339 + $0xc8] sm:$0xff] %vm794, %v787
        %821 = vst.msk [vmem:[%s339 + $0xd0] sm:$0xff] %vm794, %v788
        %822 = vst.msk [vmem:[%s339 + $0xd8] sm:$0xff] %vm794, %v789
        %823 = vst.msk [vmem:[%s339 + $0xe0] sm:$0xff] %vm794, %v790
        %824 = vst.msk [vmem:[%s339 + $0xe8] sm:$0xff] %vm794, %v791
        %825 = vst.msk [vmem:[%s339 + $0xf0] sm:$0xff] %vm794, %v792
        %826 = vst.msk [vmem:[%s339 + $0xf8] sm:$0xff] %vm794, %v793
        %v827 = vadd.f32 %v528, %v635
        %v828 = vadd.f32 %v529, %v637
        %v829 = vadd.f32 %v530, %v639
        %v830 = vadd.f32 %v531, %v641
        %v831 = vadd.f32 %v532, %v643
        %v832 = vadd.f32 %v533, %v645
        %v833 = vadd.f32 %v534, %v647
        %v834 = vadd.f32 %v535, %v649
        %v835 = vadd.f32 %v536, %v651
        %v836 = vadd.f32 %v537, %v653
        %v837 = vadd.f32 %v538, %v655
        %v838 = vadd.f32 %v539, %v657
        %v839 = vadd.f32 %v540, %v659
        %v840 = vadd.f32 %v541, %v661
        %v841 = vadd.f32 %v542, %v663
        %v842 = vadd.f32 %v543, %v665
        %v843 = vadd.f32 %v544, %v667
        %v844 = vadd.f32 %v545, %v669
        %v845 = vadd.f32 %v546, %v671
        %v846 = vadd.f32 %v547, %v673
        %v847 = vadd.f32 %v548, %v675
        %v848 = vadd.f32 %v549, %v677
        %v849 = vadd.f32 %v550, %v679
        %v850 = vadd.f32 %v551, %v681
        %v851 = vadd.f32 %v552, %v683
        %v852 = vadd.f32 %v553, %v685
        %v853 = vadd.f32 %v554, %v687
        %v854 = vadd.f32 %v555, %v689
        %v855 = vadd.f32 %v556, %v691
        %v856 = vadd.f32 %v557, %v693
        %v857 = vadd.f32 %v558, %v695
        %v858 = vadd.f32 %v559, %v697
        %v859 = vmul.f32 %v827, %v601
        %v860 = vmul.f32 %v828, %v601
        %v861 = vmul.f32 %v829, %v601
        %v862 = vmul.f32 %v830, %v601
        %v863 = vmul.f32 %v831, %v601
        %v864 = vmul.f32 %v832, %v601
        %v865 = vmul.f32 %v833, %v601
        %v866 = vmul.f32 %v834, %v601
        %v867 = vmul.f32 %v835, %v601
        %v868 = vmul.f32 %v836, %v601
        %v869 = vmul.f32 %v837, %v601
        %v870 = vmul.f32 %v838, %v601
        %v871 = vmul.f32 %v839, %v601
        %v872 = vmul.f32 %v840, %v601
        %v873 = vmul.f32 %v841, %v601
        %v874 = vmul.f32 %v842, %v601
        %v875 = vmul.f32 %v843, %v601
        %v876 = vmul.f32 %v844, %v601
        %v877 = vmul.f32 %v845, %v601
        %v878 = vmul.f32 %v846, %v601
        %v879 = vmul.f32 %v847, %v601
        %v880 = vmul.f32 %v848, %v601
        %v881 = vmul.f32 %v849, %v601
        %v882 = vmul.f32 %v850, %v601
        %v883 = vmul.f32 %v851, %v601
        %v884 = vmul.f32 %v852, %v601
        %v885 = vmul.f32 %v853, %v601
        %v886 = vmul.f32 %v854, %v601
        %v887 = vmul.f32 %v855, %v601
        %v888 = vmul.f32 %v856, %v601
        %v889 = vmul.f32 %v857, %v601
        %v890 = vmul.f32 %v858, %v601
        %923 = vrot.lane.b32.xlu0 %v859, 2
        %v924 = vpop.permute.xlu0 %923
        %925 = vrot.lane.b32.xlu0 %v860, 2
        %v926 = vpop.permute.xlu0 %925
        %927 = vrot.lane.b32.xlu0 %v861, 2
        %v928 = vpop.permute.xlu0 %927
        %929 = vrot.lane.b32.xlu0 %v862, 2
        %v930 = vpop.permute.xlu0 %929
        %931 = vrot.lane.b32.xlu0 %v863, 2
        %v932 = vpop.permute.xlu0 %931
        %933 = vrot.lane.b32.xlu0 %v864, 2
        %v934 = vpop.permute.xlu0 %933
        %935 = vrot.lane.b32.xlu0 %v865, 2
        %v936 = vpop.permute.xlu0 %935
        %937 = vrot.lane.b32.xlu0 %v866, 2
        %v938 = vpop.permute.xlu0 %937
        %939 = vrot.lane.b32.xlu0 %v867, 2
        %v940 = vpop.permute.xlu0 %939
        %941 = vrot.lane.b32.xlu0 %v868, 2
        %v942 = vpop.permute.xlu0 %941
        %943 = vrot.lane.b32.xlu0 %v869, 2
        %v944 = vpop.permute.xlu0 %943
        %945 = vrot.lane.b32.xlu0 %v870, 2
        %v946 = vpop.permute.xlu0 %945
        %947 = vrot.lane.b32.xlu0 %v871, 2
        %v948 = vpop.permute.xlu0 %947
        %949 = vrot.lane.b32.xlu0 %v872, 2
        %v950 = vpop.permute.xlu0 %949
        %951 = vrot.lane.b32.xlu0 %v873, 2
        %v952 = vpop.permute.xlu0 %951
        %953 = vrot.lane.b32.xlu0 %v874, 2
        %v954 = vpop.permute.xlu0 %953
        %955 = vrot.lane.b32.xlu0 %v875, 2
        %v956 = vpop.permute.xlu0 %955
        %957 = vrot.lane.b32.xlu0 %v876, 2
        %v958 = vpop.permute.xlu0 %957
        %959 = vrot.lane.b32.xlu0 %v877, 2
        %v960 = vpop.permute.xlu0 %959
        %961 = vrot.lane.b32.xlu0 %v878, 2
        %v962 = vpop.permute.xlu0 %961
        %963 = vrot.lane.b32.xlu0 %v879, 2
        %v964 = vpop.permute.xlu0 %963
        %965 = vrot.lane.b32.xlu0 %v880, 2
        %v966 = vpop.permute.xlu0 %965
        %967 = vrot.lane.b32.xlu0 %v881, 2
        %v968 = vpop.permute.xlu0 %967
        %969 = vrot.lane.b32.xlu0 %v882, 2
        %v970 = vpop.permute.xlu0 %969
        %971 = vrot.lane.b32.xlu0 %v883, 2
        %v972 = vpop.permute.xlu0 %971
        %973 = vrot.lane.b32.xlu0 %v884, 2
        %v974 = vpop.permute.xlu0 %973
        %975 = vrot.lane.b32.xlu0 %v885, 2
        %v976 = vpop.permute.xlu0 %975
        %977 = vrot.lane.b32.xlu0 %v886, 2
        %v978 = vpop.permute.xlu0 %977
        %979 = vrot.lane.b32.xlu0 %v887, 2
        %v980 = vpop.permute.xlu0 %979
        %981 = vrot.lane.b32.xlu0 %v888, 2
        %v982 = vpop.permute.xlu0 %981
        %983 = vrot.lane.b32.xlu0 %v889, 2
        %v984 = vpop.permute.xlu0 %983
        %985 = vrot.lane.b32.xlu0 %v890, 2
        %v986 = vpop.permute.xlu0 %985
        %vm1019 = vcmask 31760
        %1020 = vst.msk [vmem:[%s339] sm:$0xff] %vm1019, %v924
        %1021 = vst.msk [vmem:[%s339 + $0x8] sm:$0xff] %vm1019, %v926
        %1022 = vst.msk [vmem:[%s339 + $0x10] sm:$0xff] %vm1019, %v928
        %1023 = vst.msk [vmem:[%s339 + $0x18] sm:$0xff] %vm1019, %v930
        %1024 = vst.msk [vmem:[%s339 + $0x20] sm:$0xff] %vm1019, %v932
        %1025 = vst.msk [vmem:[%s339 + $0x28] sm:$0xff] %vm1019, %v934
        %1026 = vst.msk [vmem:[%s339 + $0x30] sm:$0xff] %vm1019, %v936
        %1027 = vst.msk [vmem:[%s339 + $0x38] sm:$0xff] %vm1019, %v938
        %1028 = vst.msk [vmem:[%s339 + $0x40] sm:$0xff] %vm1019, %v940
        %1029 = vst.msk [vmem:[%s339 + $0x48] sm:$0xff] %vm1019, %v942
        %1030 = vst.msk [vmem:[%s339 + $0x50] sm:$0xff] %vm1019, %v944
        %1031 = vst.msk [vmem:[%s339 + $0x58] sm:$0xff] %vm1019, %v946
        %1032 = vst.msk [vmem:[%s339 + $0x60] sm:$0xff] %vm1019, %v948
        %1033 = vst.msk [vmem:[%s339 + $0x68] sm:$0xff] %vm1019, %v950
        %1034 = vst.msk [vmem:[%s339 + $0x70] sm:$0xff] %vm1019, %v952
        %1035 = vst.msk [vmem:[%s339 + $0x78] sm:$0xff] %vm1019, %v954
        %1036 = vst.msk [vmem:[%s339 + $0x80] sm:$0xff] %vm1019, %v956
        %1037 = vst.msk [vmem:[%s339 + $0x88] sm:$0xff] %vm1019, %v958
        %1038 = vst.msk [vmem:[%s339 + $0x90] sm:$0xff] %vm1019, %v960
        %1039 = vst.msk [vmem:[%s339 + $0x98] sm:$0xff] %vm1019, %v962
        %1040 = vst.msk [vmem:[%s339 + $0xa0] sm:$0xff] %vm1019, %v964
        %1041 = vst.msk [vmem:[%s339 + $0xa8] sm:$0xff] %vm1019, %v966
        %1042 = vst.msk [vmem:[%s339 + $0xb0] sm:$0xff] %vm1019, %v968
        %1043 = vst.msk [vmem:[%s339 + $0xb8] sm:$0xff] %vm1019, %v970
        %1044 = vst.msk [vmem:[%s339 + $0xc0] sm:$0xff] %vm1019, %v972
        %1045 = vst.msk [vmem:[%s339 + $0xc8] sm:$0xff] %vm1019, %v974
        %1046 = vst.msk [vmem:[%s339 + $0xd0] sm:$0xff] %vm1019, %v976
        %1047 = vst.msk [vmem:[%s339 + $0xd8] sm:$0xff] %vm1019, %v978
        %1048 = vst.msk [vmem:[%s339 + $0xe0] sm:$0xff] %vm1019, %v980
        %1049 = vst.msk [vmem:[%s339 + $0xe8] sm:$0xff] %vm1019, %v982
        %1050 = vst.msk [vmem:[%s339 + $0xf0] sm:$0xff] %vm1019, %v984
        %1051 = vst.msk [vmem:[%s339 + $0xf8] sm:$0xff] %vm1019, %v986
        %s1052 = sand.u32 %s123, 1
        %s1053 = scalar_lea.sflag [#allocation3], %s1052
        %s1054 = sand.u32 %s123, 1
        %s1055 = smul.addr %s1054, 2
        %s1056 = scalar_lea.vmem [#allocation5], %s1055
        %s1057 = sand.u32 %s151, 1
        %s1058 = scalar_lea.sflag [#allocation7], %s1057
        %s1059 = sand.u32 %s151, 1
        %s1060 = smul.addr %s1059, 2
        %s1061 = scalar_lea.vmem [#allocation6], %s1060
        %s1062 = smul.u32 32, %s29
        %p1063 = scmp.lt.s32.totalorder %s28, 1
        %s1064 = scalar_select %p1063, %s28, 1
        %p1065 = scmp.lt.s32.totalorder %s1062, 31
        %s1066 = scalar_select %p1065, %s1062, 31
        %s1067 = smul.addr %s1064, 32
        %s1068 = sadd.s32 %s1066, %s1067
        %s1069 = smul.addr %s1068, 8
        %s1070 = scalar_lea.vmem %s5, %s1069
        // Predicated region
        $region37: #{tpu_custom_call.1} parent=31 // pred_check
          %p1071 = pneg %p133
        $region38: #{tpu_custom_call.1} parent=31 // pred_check_branch
          %1073 = sbr.rel (%p1071) target = $region40
        $region39: #{tpu_custom_call.1} parent=31 // pred_region
          %s1074 = smul.u32 2, %s29
          %s1076 = ssub.s32 32, 32
          %1077 = vsyncadd %s1053, %s1076
          %s1078 = smul.addr %s28, 2
          %s1079 = sadd.s32 %s1074, %s1078
          %s1080 = smul.addr %s1079, 16
          %s1081 = scalar_lea.hbm %s3, %s1080
          %s1083 = sshll.u32 %s1056, 4
          %s1084 = int_to_ptr.vmem [resolvable:$true] %s1083
          %1086 = dma.vmem_to_hbm [thread:$0]  %s1084, 32, %s1081, %s1053
        $region40: #{tpu_custom_call.1} parent=31 // pred_fallthru
          _
        // Predicated region
        $region41: #{tpu_custom_call.1} parent=31 // pred_check
          %p1087 = pneg %p161
        $region42: #{tpu_custom_call.1} parent=31 // pred_check_branch
          %1089 = sbr.rel (%p1087) target = $region44
        $region43: #{tpu_custom_call.1} parent=31 // pred_region
          %s1090 = smul.u32 2, %s29
          %s1092 = ssub.s32 32, 32
          %1093 = vsyncadd %s1058, %s1092
          %s1094 = smul.addr %s28, 2
          %s1095 = sadd.s32 %s1090, %s1094
          %s1096 = smul.addr %s1095, 16
          %s1097 = scalar_lea.hbm %s4, %s1096
          %s1099 = sshll.u32 %s1061, 4
          %s1100 = int_to_ptr.vmem [resolvable:$true] %s1099
          %1102 = dma.vmem_to_hbm [thread:$0]  %s1100, 32, %s1097, %s1058
        $region44: #{tpu_custom_call.1} parent=31 // pred_fallthru
          _
        // Predicated region
        $region45: #{tpu_custom_call.1} parent=31 // pred_check
          %p1103 = pneg %p189
        $region46: #{tpu_custom_call.1} parent=31 // pred_check_branch
          %1105 = sbr.rel (%p1103) target = $region48
        $region47: #{tpu_custom_call.1} parent=31 // pred_region
          %s1106 = smul.u32 32, %s29
        $region48: #{tpu_custom_call.1} parent=31 // pred_fallthru
          _
      $region32: #{tpu_custom_call.1} parent=5 // pred_fallthru
        _
      %p1107 = scmp.le.s32.totalorder 2, %s19
      // Predicated region
      $region49: #{tpu_custom_call.1} parent=5 // pred_check
        %p1108 = pneg %p1107
      $region50: #{tpu_custom_call.1} parent=5 // pred_check_branch
        %1110 = sbr.rel (%p1108) target = $region52
      $region51: #{tpu_custom_call.1} parent=5 // pred_region
        %s1111 = ssub.s32 %s19, 2
        // Predicated region
        $region53: #{tpu_custom_call.1} parent=51 // pred_check
          %p1112 = pneg %p139
        $region54: #{tpu_custom_call.1} parent=51 // pred_check_branch
          %1114 = sbr.rel (%p1112) target = $region56
        $region55: #{tpu_custom_call.1} parent=51 // pred_region
          %s1115 = sand.u32 %s124, 1
          %s1116 = scalar_lea.sflag [#allocation3], %s1115
          %s1117 = sand.u32 %s124, 1
          %s1118 = smul.addr %s1117, 2
          %s1119 = scalar_lea.vmem [#allocation5], %s1118
          %1120 = dma.done %s1116, 32
        $region56: #{tpu_custom_call.1} parent=51 // pred_fallthru
          _
        // Predicated region
        $region57: #{tpu_custom_call.1} parent=51 // pred_check
          %p1121 = pneg %p167
        $region58: #{tpu_custom_call.1} parent=51 // pred_check_branch
          %1123 = sbr.rel (%p1121) target = $region60
        $region59: #{tpu_custom_call.1} parent=51 // pred_region
          %s1124 = sand.u32 %s152, 1
          %s1125 = scalar_lea.sflag [#allocation7], %s1124
          %s1126 = sand.u32 %s152, 1
          %s1127 = smul.addr %s1126, 2
          %s1128 = scalar_lea.vmem [#allocation6], %s1127
          %1129 = dma.done %s1125, 32
        $region60: #{tpu_custom_call.1} parent=51 // pred_fallthru
          _
        // Predicated region
        $region61: #{tpu_custom_call.1} parent=51 // pred_check
          %p1130 = pneg %p195
        $region62: #{tpu_custom_call.1} parent=51 // pred_check_branch
          %1132 = sbr.rel (%p1130) target = $region64
        $region63: #{tpu_custom_call.1} parent=51 // pred_region
          %s1133 = smul.u32 32, %s31
          %p1134 = scmp.lt.s32.totalorder %s30, 1
          %s1135 = scalar_select %p1134, %s30, 1
          %p1136 = scmp.lt.s32.totalorder %s1133, 31
          %s1137 = scalar_select %p1136, %s1133, 31
          %s1138 = smul.addr %s1135, 32
          %s1139 = sadd.s32 %s1137, %s1138
          %s1140 = smul.addr %s1139, 8
          %s1141 = scalar_lea.vmem %s5, %s1140
        $region64: #{tpu_custom_call.1} parent=51 // pred_fallthru
          _
      $region52: #{tpu_custom_call.1} parent=5 // pred_fallthru
        _
    $region6: #{tpu_custom_call.1} parent=1 // loop_footer
      %s23 = sadd.s32 1, %s19
    $region7: #{tpu_custom_call.1} parent=1 // loop_footer_branch
      %18 = sbr.rel target = $region3
    $region8: #{tpu_custom_call.1} parent=1 // loop_exit
      _
    %1142 = vsyncpa [#allocation3], 1
    %s1143 = scalar_lea.sflag [#allocation3], 1
    %1144 = vsyncpa %s1143, 1
    %1145 = vsyncpa [#allocation7], 1
    %s1146 = scalar_lea.sflag [#allocation7], 1
    %1147 = vsyncpa %s1146, 1
    %1148 = vsyncpa [#allocation4], 1
    %s1149 = scalar_lea.sflag [#allocation4], 1
    %1150 = vsyncpa %s1149, 1

</llo_original>
